<compile_context>
chip_gen: v7x
topology: tpu7x:2x2x1
jax: 0.10.0
libtpu: 0.0.40
codegen_flags: <defaults>
</compile_context>

<pallas_src>
import functools

import jax
import jax.numpy as jnp
from jax.experimental import pallas as pl
from jax.experimental.pallas import tpu as pltpu


def _round_up(x, m):
    return (x + m - 1) // m * m


def _vmem_capacity_bytes():
    """Best-effort per-core VMEM capacity query (fallback: 64 MiB == v7x)."""
    try:
        info = pltpu.get_tpu_info()
        for attr in ("vmem_capacity_bytes", "vmem_size_bytes", "vmem_bytes"):
            v = getattr(info, attr, None)
            if v:
                return int(v)
    except Exception:
        pass
    return 64 * 1024 * 1024


def _cplx_linear_kernel(xr_ref, xi_ref, wr_ref, wi_ref, bdiff_ref, bsum_ref,
                        or_ref, oi_ref):
    """Full-K variant: no reduction tiling; weight tiles stay VMEM-resident
    across the inner (row) grid axis."""
    xr = xr_ref[...]
    xi = xi_ref[...]
    wr = wr_ref[...]
    wi = wi_ref[...]

    # Gauss / Karatsuba complex product: 3 MXU matmuls instead of 4.
    # (wr + wi) is a per-tile VPU add hidden under the MXU work — no third
    # weight matrix is streamed from HBM.
    p1 = jnp.dot(xr, wr, preferred_element_type=jnp.float32)
    p2 = jnp.dot(xi, wi, preferred_element_type=jnp.float32)
    p3 = jnp.dot((xr + xi).astype(xr.dtype), (wr + wi).astype(wr.dtype),
                 preferred_element_type=jnp.float32)

    d = p1 - p2
    s = p1 + p2
    or_ref[...] = (d + bdiff_ref[...]).astype(or_ref.dtype)          # br - bi
    oi_ref[...] = (p3 - s + bsum_ref[...]).astype(oi_ref.dtype)      # br + bi


def _cplx_linear_kernel_acc(xr_ref, xi_ref, wr_ref, wi_ref, bdiff_ref,
                            bsum_ref, or_ref, oi_ref, accr_ref, acci_ref):
    """K-tiled variant (large in_dim): f32 accumulators keep per-step VMEM
    bounded independent of layer width (required on v7x's 64 MiB VMEM)."""
    k = pl.program_id(2)

    xr = xr_ref[...]
    xi = xi_ref[...]
    wr = wr_ref[...]
    wi = wi_ref[...]

    p1 = jnp.dot(xr, wr, preferred_element_type=jnp.float32)
    p2 = jnp.dot(xi, wi, preferred_element_type=jnp.float32)
    p3 = jnp.dot((xr + xi).astype(xr.dtype), (wr + wi).astype(wr.dtype),
                 preferred_element_type=jnp.float32)

    re_part = p1 - p2
    im_part = p3 - (p1 + p2)

    @pl.when(k == 0)
    def _():
        accr_ref[...] = re_part
        acci_ref[...] = im_part

    @pl.when(k > 0)
    def _():
        accr_ref[...] += re_part
        acci_ref[...] += im_part

    @pl.when(k == pl.num_programs(2) - 1)
    def _():
        or_ref[...] = (accr_ref[...] + bdiff_ref[...]).astype(or_ref.dtype)
        oi_ref[...] = (acci_ref[...] + bsum_ref[...]).astype(oi_ref.dtype)


@functools.partial(jax.jit, static_argnames=("tm", "tn", "tk", "matmul_dtype"))
def complex_linear(x, wr, br, wi, bi, *, tm=None, tn=256, tk=None,
                   matmul_dtype=None):
    """x: (..., in_dim, 2); wr/wi: (out_dim, in_dim); br/bi: (out_dim,).

    matmul_dtype: optional narrower dtype (e.g. jnp.bfloat16) for the MXU
    matmuls (accumulation stays f32, output keeps x.dtype).
    """
    in_dim = x.shape[-2]
    out_dim = wr.shape[0]
    lead = x.shape[:-2]
    out_dtype = x.dtype
    cdt = jnp.dtype(matmul_dtype) if matmul_dtype is not None else jnp.dtype(x.dtype)

    itemsize = cdt.itemsize
    out_itemsize = jnp.dtype(out_dtype).itemsize
    sublane = 8 if itemsize == 4 else (16 if itemsize == 2 else 32)
    lane = 128

    # ---- per-generation defaults -------------------------------------------
    vmem_cap = _vmem_capacity_bytes()
    if vmem_cap >= 128 * 1024 * 1024:          # v5e / v6e
        vmem_limit, tm_default = 100 * 1024 * 1024, 512
    elif vmem_cap >= 64 * 1024 * 1024:         # v7x: headroom below 64 MiB
        vmem_limit, tm_default = 48 * 1024 * 1024, 256
    else:                                      # unknown / small-VMEM fallback
        vmem_limit, tm_default = min(vmem_cap * 3 // 4, 48 * 1024 * 1024), 256
    if tm is None:
        tm = tm_default

    # ---- split real/imag, flatten leading dims ------------------------------
    # TODO(synk): a planar (..., 2, in_dim) activation layout (and planar
    # output) would remove these de-interleave / re-interleave HBM passes.
    xr = x[..., 0].reshape(-1, in_dim).astype(cdt)
    xi = x[..., 1].reshape(-1, in_dim).astype(cdt)
    m = xr.shape[0]

    # ---- tile sizes ----------------------------------------------------------
    tm_eff = max(sublane, min(_round_up(tm, sublane), _round_up(m, sublane)))
    m_pad = _round_up(m, tm_eff)

    n_pad = _round_up(out_dim, lane)
    tn_eff = max(lane, min(_round_up(tn, lane), n_pad))
    n_pad = _round_up(n_pad, tn_eff)

    k_pad = _round_up(in_dim, lane)   # lane-dense x loads, full MXU depth

    def _est_vmem(tk_, tiled):
        x_b = 2 * 2 * tm_eff * tk_ * itemsize        # 2 inputs, double-buffered
        w_b = 2 * 2 * tk_ * tn_eff * itemsize        # 2 weights, double-buffered
        o_b = 2 * 2 * tm_eff * tn_eff * out_itemsize
        b_b = 2 * 2 * tn_eff * 4
        a_b = (2 * tm_eff * tn_eff * 4) if tiled else 0
        t_b = 4 * tm_eff * tn_eff * 4                # live f32 intermediates
        return x_b + w_b + o_b + b_b + a_b + t_b

    budget = int(0.75 * vmem_limit)
    if _est_vmem(k_pad, False) <= budget:
        k_tiled = False
        tk_eff = k_pad
    else:
        k_tiled = True
        tk_eff = _round_up(min(tk if tk else 1024, k_pad), lane)
        while tk_eff > lane and _est_vmem(tk_eff, True) > budget:
            tk_eff = max(lane, _round_up(tk_eff // 2, lane))
        k_pad = _round_up(k_pad, tk_eff)

    # ---- pad operands (zero padding is exact) --------------------------------
    if m_pad != m or k_pad != in_dim:
        xr = jnp.pad(xr, ((0, m_pad - m), (0, k_pad - in_dim)))
        xi = jnp.pad(xi, ((0, m_pad - m), (0, k_pad - in_dim)))

    wr_t = wr.T.astype(cdt)     # (in_dim, out_dim)
    wi_t = wi.T.astype(cdt)
    if k_pad != in_dim or n_pad != out_dim:
        wr_t = jnp.pad(wr_t, ((0, k_pad - in_dim), (0, n_pad - out_dim)))
        wi_t = jnp.pad(wi_t, ((0, k_pad - in_dim), (0, n_pad - out_dim)))
    br_p = jnp.pad(br, (0, n_pad - out_dim)) if n_pad != out_dim else br
    bi_p = jnp.pad(bi, (0, n_pad - out_dim)) if n_pad != out_dim else bi

    bdiff = (br_p - bi_p).astype(jnp.float32).reshape(1, n_pad)   # br - bi
    bsum = (br_p + bi_p).astype(jnp.float32).reshape(1, n_pad)    # br + bi

    m_tiles = m_pad // tm_eff
    n_tiles = n_pad // tn_eff
    k_tiles = k_pad // tk_eff

    # Grid ordering: keep whichever operand is more expensive to re-fetch
    # resident across the inner grid axis (default: weights resident across
    # row tiles -> column axis outer, row axis inner).
    x_bytes = 2 * m_pad * k_pad * itemsize
    w_bytes = 2 * k_pad * n_pad * itemsize
    rows_inner = (n_tiles - 1) * x_bytes <= (m_tiles - 1) * w_bytes

    if not k_tiled:
        if rows_inner:
            grid = (n_tiles, m_tiles)
            x_map = lambda j, i: (i, 0)
            w_map = lambda j, i: (0, j)
            b_map = lambda j, i: (0, j)
            o_map = lambda j, i: (i, j)
        else:
            grid = (m_tiles, n_tiles)
            x_map = lambda i, j: (i, 0)
            w_map = lambda i, j: (0, j)
            b_map = lambda i, j: (0, j)
            o_map = lambda i, j: (i, j)
        kernel = _cplx_linear_kernel
        scratch = []
        semantics = ("parallel", "parallel")
    else:
        if rows_inner:
            grid = (n_tiles, m_tiles, k_tiles)
            x_map = lambda j, i, k: (i, k)
            w_map = lambda j, i, k: (k, j)
            b_map = lambda j, i, k: (0, j)
            o_map = lambda j, i, k: (i, j)
        else:
            grid = (m_tiles, n_tiles, k_tiles)
            x_map = lambda i, j, k: (i, k)
            w_map = lambda i, j, k: (k, j)
            b_map = lambda i, j, k: (0, j)
            o_map = lambda i, j, k: (i, j)
        kernel = _cplx_linear_kernel_acc
        scratch = [pltpu.VMEM((tm_eff, tn_eff), jnp.float32),
                   pltpu.VMEM((tm_eff, tn_eff), jnp.float32)]
        semantics = ("parallel", "parallel", "arbitrary")

    x_spec = pl.BlockSpec((tm_eff, tk_eff), x_map)
    w_spec = pl.BlockSpec((tk_eff, tn_eff), w_map)
    b_spec = pl.BlockSpec((1, tn_eff), b_map)
    out_spec = pl.BlockSpec((tm_eff, tn_eff), o_map)

    out_r, out_i = pl.pallas_call(
        kernel,
        out_shape=(
            jax.ShapeDtypeStruct((m_pad, n_pad), out_dtype),
            jax.ShapeDtypeStruct((m_pad, n_pad), out_dtype),
        ),
        grid_spec=pltpu.PrefetchScalarGridSpec(
            num_scalar_prefetch=0,
            grid=grid,
            in_specs=[x_spec, x_spec, w_spec, w_spec, b_spec, b_spec],
            out_specs=(out_spec, out_spec),
            scratch_shapes=scratch,
        ),
        compiler_params=pltpu.CompilerParams(
            dimension_semantics=semantics,
            vmem_limit_bytes=vmem_limit,
        ),
    )(xr, xi, wr_t, wi_t, bdiff, bsum)

    out_r = out_r[:m, :out_dim].reshape(*lead, out_dim)
    out_i = out_i[:m, :out_dim].reshape(*lead, out_dim)
    # TODO(synk): emit planar (2, ..., out_dim) output when the consumer can
    # accept it, to skip this re-interleave HBM pass.
    return jnp.stack([out_r, out_i], axis=-1)


def _reference(x, wr, br, wi, bi):
    xr = x[..., 0]
    xi = x[..., 1]
    real_lin = lambda v: v @ wr.T + br
    imag_lin = lambda v: v @ wi.T + bi
    out_r = real_lin(xr) - imag_lin(xi)
    out_i = real_lin(xi) + imag_lin(xr)
    return jnp.stack([out_r, out_i], axis=-1)


if __name__ == "__main__":
    key = jax.random.PRNGKey(0)
    batch, seq, in_dim, out_dim = 2, 8, 32, 32

    k_x, k_wr, k_br, k_wi, k_bi = jax.random.split(key, 5)

    # Deterministic params, matching nn.Linear's U(-1/sqrt(in_dim), 1/sqrt(in_dim)).
    bound = 1.0 / jnp.sqrt(jnp.float32(in_dim))
    wr = jax.random.uniform(k_wr, (out_dim, in_dim), jnp.float32, -bound, bound)
    br = jax.random.uniform(k_br, (out_dim,), jnp.float32, -bound, bound)
    wi = jax.random.uniform(k_wi, (out_dim, in_dim), jnp.float32, -bound, bound)
    bi = jax.random.uniform(k_bi, (out_dim,), jnp.float32, -bound, bound)

    x = jax.random.normal(k_x, (batch, seq, in_dim, 2), jnp.float32)

    out = complex_linear(x, wr, br, wi, bi)
    out = jax.block_until_ready(out)

    ref = _reference(x, wr, br, wi, bi)
    assert out.shape == (batch, seq, out_dim, 2), out.shape
    assert jnp.allclose(out, ref, atol=1e-4, rtol=1e-4), float(
        jnp.max(jnp.abs(out - ref)))

    print("KERNEL_OK")
</pallas_src>

<mosaic_0001>
module attributes {stable_mosaic.version = 11 : i64} {
  func.func @_cplx_linear_kernel(%arg0: i32, %arg1: i32, %arg2: memref<16x128xf32, #tpu.memory_space<vmem>>, %arg3: memref<16x128xf32, #tpu.memory_space<vmem>>, %arg4: memref<128x128xf32, #tpu.memory_space<vmem>>, %arg5: memref<128x128xf32, #tpu.memory_space<vmem>>, %arg6: memref<1x128xf32, #tpu.memory_space<vmem>>, %arg7: memref<1x128xf32, #tpu.memory_space<vmem>>, %arg8: memref<16x128xf32, #tpu.memory_space<vmem>>, %arg9: memref<16x128xf32, #tpu.memory_space<vmem>>) attributes {dimension_semantics = [#tpu.dimension_semantics<parallel>, #tpu.dimension_semantics<parallel>], iteration_bounds = array<i64: 1, 1>, scalar_prefetch = 0 : i64, scratch_operands = 0 : i64, tpu.core_type = #tpu.core_type<tc>, window_params = [{transform_indices = @transform_0, window_bounds = array<i64: 16, 128>}, {transform_indices = @transform_1, window_bounds = array<i64: 16, 128>}, {transform_indices = @transform_2, window_bounds = array<i64: 128, 128>}, {transform_indices = @transform_3, window_bounds = array<i64: 128, 128>}, {transform_indices = @transform_4, window_bounds = array<i64: 1, 128>}, {transform_indices = @transform_5, window_bounds = array<i64: 1, 128>}, {transform_indices = @transform_6, window_bounds = array<i64: 16, 128>}, {transform_indices = @transform_7, window_bounds = array<i64: 16, 128>}]} {
    %c0 = arith.constant 0 : index
    %c0_0 = arith.constant 0 : index
    %0 = vector.load %arg2[%c0, %c0_0] : memref<16x128xf32, #tpu.memory_space<vmem>>, vector<16x128xf32>
    %c0_1 = arith.constant 0 : index
    %c0_2 = arith.constant 0 : index
    %1 = vector.load %arg3[%c0_1, %c0_2] : memref<16x128xf32, #tpu.memory_space<vmem>>, vector<16x128xf32>
    %c0_3 = arith.constant 0 : index
    %c0_4 = arith.constant 0 : index
    %2 = vector.load %arg4[%c0_3, %c0_4] : memref<128x128xf32, #tpu.memory_space<vmem>>, vector<128x128xf32>
    %c0_5 = arith.constant 0 : index
    %c0_6 = arith.constant 0 : index
    %3 = vector.load %arg5[%c0_5, %c0_6] : memref<128x128xf32, #tpu.memory_space<vmem>>, vector<128x128xf32>
    %cst = arith.constant dense<0.000000e+00> : vector<16x128xf32>
    %4 = tpu.matmul %0, %2, %cst {dimension_numbers = #tpu.dot_dimension_numbers<[1], [0], [0], [1], [0, 0, 1, 1], [], []>} : vector<16x128xf32>, vector<128x128xf32>, vector<16x128xf32> -> vector<16x128xf32>
    %cst_7 = arith.constant dense<0.000000e+00> : vector<16x128xf32>
    %5 = tpu.matmul %1, %3, %cst_7 {dimension_numbers = #tpu.dot_dimension_numbers<[1], [0], [0], [1], [0, 0, 1, 1], [], []>} : vector<16x128xf32>, vector<128x128xf32>, vector<16x128xf32> -> vector<16x128xf32>
    %6 = arith.addf %0, %1 : vector<16x128xf32>
    %7 = arith.addf %2, %3 : vector<128x128xf32>
    %cst_8 = arith.constant dense<0.000000e+00> : vector<16x128xf32>
    %8 = tpu.matmul %6, %7, %cst_8 {dimension_numbers = #tpu.dot_dimension_numbers<[1], [0], [0], [1], [0, 0, 1, 1], [], []>} : vector<16x128xf32>, vector<128x128xf32>, vector<16x128xf32> -> vector<16x128xf32>
    %9 = arith.subf %4, %5 : vector<16x128xf32>
    %10 = arith.addf %4, %5 : vector<16x128xf32>
    %c0_9 = arith.constant 0 : index
    %c0_10 = arith.constant 0 : index
    %11 = vector.load %arg6[%c0_9, %c0_10] : memref<1x128xf32, #tpu.memory_space<vmem>>, vector<1x128xf32>
    %12 = vector.broadcast %11 : vector<1x128xf32> to vector<16x128xf32>
    %13 = arith.addf %9, %12 : vector<16x128xf32>
    %c0_11 = arith.constant 0 : index
    %c0_12 = arith.constant 0 : index
    %14 = vector.load %arg8[%c0_11, %c0_12] : memref<16x128xf32, #tpu.memory_space<vmem>>, vector<16x128xf32>
    tpu.vector_store %arg8[%c0_11, %c0_12], %13 {strides = array<i32>} : memref<16x128xf32, #tpu.memory_space<vmem>>, vector<16x128xf32>,
    %15 = arith.subf %8, %10 : vector<16x128xf32>
    %c0_13 = arith.constant 0 : index
    %c0_14 = arith.constant 0 : index
    %16 = vector.load %arg7[%c0_13, %c0_14] : memref<1x128xf32, #tpu.memory_space<vmem>>, vector<1x128xf32>
    %17 = vector.broadcast %16 : vector<1x128xf32> to vector<16x128xf32>
    %18 = arith.addf %15, %17 : vector<16x128xf32>
    %c0_15 = arith.constant 0 : index
    %c0_16 = arith.constant 0 : index
    %19 = vector.load %arg9[%c0_15, %c0_16] : memref<16x128xf32, #tpu.memory_space<vmem>>, vector<16x128xf32>
    tpu.vector_store %arg9[%c0_15, %c0_16], %18 {strides = array<i32>} : memref<16x128xf32, #tpu.memory_space<vmem>>, vector<16x128xf32>,
    return
  }
  func.func @transform_0(%arg0: i32, %arg1: i32) -> (i32, i32) {
    %c0_i32 = arith.constant 0 : i32
    %c0_i32_0 = arith.constant 0 : i32
    return %arg1, %c0_i32 : i32, i32
  }
  func.func @transform_1(%arg0: i32, %arg1: i32) -> (i32, i32) {
    %c0_i32 = arith.constant 0 : i32
    %c0_i32_0 = arith.constant 0 : i32
    return %arg1, %c0_i32 : i32, i32
  }
  func.func @transform_2(%arg0: i32, %arg1: i32) -> (i32, i32) {
    %c0_i32 = arith.constant 0 : i32
    %c0_i32_0 = arith.constant 0 : i32
    return %c0_i32, %arg0 : i32, i32
  }
  func.func @transform_3(%arg0: i32, %arg1: i32) -> (i32, i32) {
    %c0_i32 = arith.constant 0 : i32
    %c0_i32_0 = arith.constant 0 : i32
    return %c0_i32, %arg0 : i32, i32
  }
  func.func @transform_4(%arg0: i32, %arg1: i32) -> (i32, i32) {
    %c0_i32 = arith.constant 0 : i32
    %c0_i32_0 = arith.constant 0 : i32
    return %c0_i32, %arg0 : i32, i32
  }
  func.func @transform_5(%arg0: i32, %arg1: i32) -> (i32, i32) {
    %c0_i32 = arith.constant 0 : i32
    %c0_i32_0 = arith.constant 0 : i32
    return %c0_i32, %arg0 : i32, i32
  }
  func.func @transform_6(%arg0: i32, %arg1: i32) -> (i32, i32) {
    %c0_i32 = arith.constant 0 : i32
    return %arg1, %arg0 : i32, i32
  }
  func.func @transform_7(%arg0: i32, %arg1: i32) -> (i32, i32) {
    %c0_i32 = arith.constant 0 : i32
    return %arg1, %arg0 : i32, i32
  }
}

</mosaic_0001>

<llo_original>
// kernel: complex_linear.1
$region0: #{complex_linear.1}
  #allocation0 [shape = 'u32[]', space=smem, size = 0x4, offset = 0x4, fixed_abs, tag = 'smem constant byte address 0x4 - core index']
  #allocation1 [shape = 'u32[144,128]{1,0:T(1,128)}', space=vmem, size = 0x12000, scoped, tag = 'internal scratch']
  %s0 = inlined_call_operand.vmem [shape: f32[16,128], index: 0, kind: input, shape index: {}]
  %s1 = inlined_call_operand.vmem [shape: f32[16,128], index: 1, kind: input, shape index: {}]
  %s2 = inlined_call_operand.vmem [shape: f32[128,128], index: 2, kind: input, shape index: {}]
  %s3 = inlined_call_operand.vmem [shape: f32[128,128], index: 3, kind: input, shape index: {}]
  %s4 = inlined_call_operand.vmem [shape: f32[1,128], index: 4, kind: input, shape index: {}]
  %s5 = inlined_call_operand.vmem [shape: f32[1,128], index: 5, kind: input, shape index: {}]
  %s6 = inlined_call_operand.vmem [shape: f32[16,128], index: 6, kind: output, shape index: {0}]
  %s7 = inlined_call_operand.vmem [shape: f32[16,128], index: 7, kind: output, shape index: {1}]
  %8 = xla_tuple %s6, %s7
  %s9 = sld [smem:[#allocation0]]
  $region42: #{complex_linear.1} parent=0
    _
  %s11 = ssub.s32 1, %s9
  %s12 = scalar_select 0, %s11, %s9
  // Predicated region
  $region2: #{complex_linear.1} parent=0 // pred_check
    _
  $region3: #{complex_linear.1} parent=0 // pred_check_branch
    %14 = sbr.rel (0) target = $region5
  $region4: #{complex_linear.1} parent=0 // pred_region
    _
  $region5: #{complex_linear.1} parent=0 // pred_fallthru
    _
  // Predicated region
  $region6: #{complex_linear.1} parent=0 // pred_check
    _
  $region7: #{complex_linear.1} parent=0 // pred_check_branch
    %16 = sbr.rel (0) target = $region9
  $region8: #{complex_linear.1} parent=0 // pred_region
    _
  $region9: #{complex_linear.1} parent=0 // pred_fallthru
    _
  // Predicated region
  $region10: #{complex_linear.1} parent=0 // pred_check
    _
  $region11: #{complex_linear.1} parent=0 // pred_check_branch
    %18 = sbr.rel (0) target = $region13
  $region12: #{complex_linear.1} parent=0 // pred_region
    _
  $region13: #{complex_linear.1} parent=0 // pred_fallthru
    _
  // Predicated region
  $region14: #{complex_linear.1} parent=0 // pred_check
    _
  $region15: #{complex_linear.1} parent=0 // pred_check_branch
    %20 = sbr.rel (0) target = $region17
  $region16: #{complex_linear.1} parent=0 // pred_region
    _
  $region17: #{complex_linear.1} parent=0 // pred_fallthru
    _
  // Predicated region
  $region18: #{complex_linear.1} parent=0 // pred_check
    _
  $region19: #{complex_linear.1} parent=0 // pred_check_branch
    %22 = sbr.rel (0) target = $region21
  $region20: #{complex_linear.1} parent=0 // pred_region
    _
  $region21: #{complex_linear.1} parent=0 // pred_fallthru
    _
  // Predicated region
  $region22: #{complex_linear.1} parent=0 // pred_check
    _
  $region23: #{complex_linear.1} parent=0 // pred_check_branch
    %24 = sbr.rel (0) target = $region25
  $region24: #{complex_linear.1} parent=0 // pred_region
    _
  $region25: #{complex_linear.1} parent=0 // pred_fallthru
    _
  %v25 = vld [vmem:[%s0] sm:$0xff]
  %v26 = vld [vmem:[%s0 + $0x8] sm:$0xff]
  %v27 = vld [vmem:[%s1] sm:$0xff]
  %v28 = vld [vmem:[%s1 + $0x8] sm:$0xff]
  %v29 = vld [vmem:[%s2] sm:$0xff]
  %v30 = vld [vmem:[%s2 + $0x8] sm:$0xff]
  %v31 = vld [vmem:[%s2 + $0x10] sm:$0xff]
  %v32 = vld [vmem:[%s2 + $0x18] sm:$0xff]
  %v33 = vld [vmem:[%s2 + $0x20] sm:$0xff]
  %v34 = vld [vmem:[%s2 + $0x28] sm:$0xff]
  %v35 = vld [vmem:[%s2 + $0x30] sm:$0xff]
  %v36 = vld [vmem:[%s2 + $0x38] sm:$0xff]
  %v37 = vld [vmem:[%s2 + $0x40] sm:$0xff]
  %v38 = vld [vmem:[%s2 + $0x48] sm:$0xff]
  %v39 = vld [vmem:[%s2 + $0x50] sm:$0xff]
  %v40 = vld [vmem:[%s2 + $0x58] sm:$0xff]
  %v41 = vld [vmem:[%s2 + $0x60] sm:$0xff]
  %v42 = vld [vmem:[%s2 + $0x68] sm:$0xff]
  %v43 = vld [vmem:[%s2 + $0x70] sm:$0xff]
  %v44 = vld [vmem:[%s2 + $0x78] sm:$0xff]
  %v45 = vld [vmem:[%s3] sm:$0xff]
  %v46 = vld [vmem:[%s3 + $0x8] sm:$0xff]
  %v47 = vld [vmem:[%s3 + $0x10] sm:$0xff]
  %v48 = vld [vmem:[%s3 + $0x18] sm:$0xff]
  %v49 = vld [vmem:[%s3 + $0x20] sm:$0xff]
  %v50 = vld [vmem:[%s3 + $0x28] sm:$0xff]
  %v51 = vld [vmem:[%s3 + $0x30] sm:$0xff]
  %v52 = vld [vmem:[%s3 + $0x38] sm:$0xff]
  %v53 = vld [vmem:[%s3 + $0x40] sm:$0xff]
  %v54 = vld [vmem:[%s3 + $0x48] sm:$0xff]
  %v55 = vld [vmem:[%s3 + $0x50] sm:$0xff]
  %v56 = vld [vmem:[%s3 + $0x58] sm:$0xff]
  %v57 = vld [vmem:[%s3 + $0x60] sm:$0xff]
  %v58 = vld [vmem:[%s3 + $0x68] sm:$0xff]
  %v59 = vld [vmem:[%s3 + $0x70] sm:$0xff]
  %v60 = vld [vmem:[%s3 + $0x78] sm:$0xff]
  %61 = vmatprep.subr.mxu0 0.0
  %62 = vmatpush1.msra.mxu0 %v29
  %63 = vmatprep.subr.mxu0 0.0
  %64 = vmatpush1.msra.mxu0 %v30
  %65 = vmatprep.subr.mxu0 0.0
  %66 = vmatpush1.msra.mxu0 %v31
  %67 = vmatprep.subr.mxu0 0.0
  %68 = vmatpush1.msra.mxu0 %v32
  %69 = vmatprep.subr.mxu0 0.0
  %70 = vmatpush1.msra.mxu0 %v33
  %71 = vmatprep.subr.mxu0 0.0
  %72 = vmatpush1.msra.mxu0 %v34
  %73 = vmatprep.subr.mxu0 0.0
  %74 = vmatpush1.msra.mxu0 %v35
  %75 = vmatprep.subr.mxu0 0.0
  %76 = vmatpush1.msra.mxu0 %v36
  %77 = vmatprep.subr.mxu0 0.0
  %78 = vmatpush1.msra.mxu0 %v37
  %79 = vmatprep.subr.mxu0 0.0
  %80 = vmatpush1.msra.mxu0 %v38
  %81 = vmatprep.subr.mxu0 0.0
  %82 = vmatpush1.msra.mxu0 %v39
  %83 = vmatprep.subr.mxu0 0.0
  %84 = vmatpush1.msra.mxu0 %v40
  %85 = vmatprep.subr.mxu0 0.0
  %86 = vmatpush1.msra.mxu0 %v41
  %87 = vmatprep.subr.mxu0 0.0
  %88 = vmatpush1.msra.mxu0 %v42
  %89 = vmatprep.subr.mxu0 0.0
  %90 = vmatpush1.msra.mxu0 %v43
  %91 = vmatprep.subr.mxu0 0.0
  %92 = vmatpush1.msra.mxu0 %v44
  %93 = vmatprep.subr.mxu0 0.0
  %94 = vmatpush1.msra.mxu0 0.0
  %95 = vmatprep.subr.mxu0 0.0
  %96 = vmatpush1.msra.mxu0 0.0
  %97 = vmatprep.subr.mxu0 0.0
  %98 = vmatpush1.msra.mxu0 0.0
  %99 = vmatprep.subr.mxu0 0.0
  %100 = vmatpush1.msra.mxu0 0.0
  %101 = vmatprep.subr.mxu0 0.0
  %102 = vmatpush1.msra.mxu0 0.0
  %103 = vmatprep.subr.mxu0 0.0
  %104 = vmatpush1.msra.mxu0 0.0
  %105 = vmatprep.subr.mxu0 0.0
  %106 = vmatpush1.msra.mxu0 0.0
  %107 = vmatprep.subr.mxu0 0.0
  %108 = vmatpush1.msra.mxu0 0.0
  %109 = vmatprep.subr.mxu0 0.0
  %110 = vmatpush1.msra.mxu0 0.0
  %111 = vmatprep.subr.mxu0 0.0
  %112 = vmatpush1.msra.mxu0 0.0
  %113 = vmatprep.subr.mxu0 0.0
  %114 = vmatpush1.msra.mxu0 0.0
  %115 = vmatprep.subr.mxu0 0.0
  %116 = vmatpush1.msra.mxu0 0.0
  %117 = vmatprep.subr.mxu0 0.0
  %118 = vmatpush1.msra.mxu0 0.0
  %119 = vmatprep.subr.mxu0 0.0
  %120 = vmatpush1.msra.mxu0 0.0
  %121 = vmatprep.subr.mxu0 0.0
  %122 = vmatpush1.msra.mxu0 0.0
  %123 = vmatprep.subr.mxu0 0.0
  %124 = vmatpush1.msra.mxu0 0.0
  %125 = vmatprep.mubr.f32.mxu0 0.0
  %126 = vmatmul.mubr.f32.gmra.mrb[0].mxu0 %v25
  %v127 = vpop.f32.mrb[0].mxu0
  %v128 = vadd.f32 0.0, %v127
  %v129 = vpop.f32.mrb[0].mxu0
  %130 = vmatprep.mubr.f32.mxu0 0.0
  %131 = vmatmul.mubr.f32.gmra.mrb[0].mxu0 %v26
  %v132 = vpop.f32.mrb[0].mxu0
  %v133 = vadd.f32 0.0, %v132
  %v134 = vpop.f32.mrb[0].mxu0
  %135 = vdwg.mxu0
  %136 = vmatprep.subr.mxu0 0.0
  %137 = vmatpush1.msra.mxu0 %v45
  %138 = vmatprep.subr.mxu0 0.0
  %139 = vmatpush1.msra.mxu0 %v46
  %140 = vmatprep.subr.mxu0 0.0
  %141 = vmatpush1.msra.mxu0 %v47
  %142 = vmatprep.subr.mxu0 0.0
  %143 = vmatpush1.msra.mxu0 %v48
  %144 = vmatprep.subr.mxu0 0.0
  %145 = vmatpush1.msra.mxu0 %v49
  %146 = vmatprep.subr.mxu0 0.0
  %147 = vmatpush1.msra.mxu0 %v50
  %148 = vmatprep.subr.mxu0 0.0
  %149 = vmatpush1.msra.mxu0 %v51
  %150 = vmatprep.subr.mxu0 0.0
  %151 = vmatpush1.msra.mxu0 %v52
  %152 = vmatprep.subr.mxu0 0.0
  %153 = vmatpush1.msra.mxu0 %v53
  %154 = vmatprep.subr.mxu0 0.0
  %155 = vmatpush1.msra.mxu0 %v54
  %156 = vmatprep.subr.mxu0 0.0
  %157 = vmatpush1.msra.mxu0 %v55
  %158 = vmatprep.subr.mxu0 0.0
  %159 = vmatpush1.msra.mxu0 %v56
  %160 = vmatprep.subr.mxu0 0.0
  %161 = vmatpush1.msra.mxu0 %v57
  %162 = vmatprep.subr.mxu0 0.0
  %163 = vmatpush1.msra.mxu0 %v58
  %164 = vmatprep.subr.mxu0 0.0
  %165 = vmatpush1.msra.mxu0 %v59
  %166 = vmatprep.subr.mxu0 0.0
  %167 = vmatpush1.msra.mxu0 %v60
  %168 = vmatprep.subr.mxu0 0.0
  %169 = vmatpush1.msra.mxu0 0.0
  %170 = vmatprep.subr.mxu0 0.0
  %171 = vmatpush1.msra.mxu0 0.0
  %172 = vmatprep.subr.mxu0 0.0
  %173 = vmatpush1.msra.mxu0 0.0
  %174 = vmatprep.subr.mxu0 0.0
  %175 = vmatpush1.msra.mxu0 0.0
  %176 = vmatprep.subr.mxu0 0.0
  %177 = vmatpush1.msra.mxu0 0.0
  %178 = vmatprep.subr.mxu0 0.0
  %179 = vmatpush1.msra.mxu0 0.0
  %180 = vmatprep.subr.mxu0 0.0
  %181 = vmatpush1.msra.mxu0 0.0
  %182 = vmatprep.subr.mxu0 0.0
  %183 = vmatpush1.msra.mxu0 0.0
  %184 = vmatprep.subr.mxu0 0.0
  %185 = vmatpush1.msra.mxu0 0.0
  %186 = vmatprep.subr.mxu0 0.0
  %187 = vmatpush1.msra.mxu0 0.0
  %188 = vmatprep.subr.mxu0 0.0
  %189 = vmatpush1.msra.mxu0 0.0
  %190 = vmatprep.subr.mxu0 0.0
  %191 = vmatpush1.msra.mxu0 0.0
  %192 = vmatprep.subr.mxu0 0.0
  %193 = vmatpush1.msra.mxu0 0.0
  %194 = vmatprep.subr.mxu0 0.0
  %195 = vmatpush1.msra.mxu0 0.0
  %196 = vmatprep.subr.mxu0 0.0
  %197 = vmatpush1.msra.mxu0 0.0
  %198 = vmatprep.subr.mxu0 0.0
  %199 = vmatpush1.msra.mxu0 0.0
  %200 = vmatprep.mubr.f32.mxu0 0.0
  %201 = vmatmul.mubr.f32.gmra.mrb[0].mxu0 %v27
  %v202 = vpop.f32.mrb[0].mxu0
  %v203 = vadd.f32 0.0, %v202
  %v204 = vpop.f32.mrb[0].mxu0
  %205 = vmatprep.mubr.f32.mxu0 0.0
  %206 = vmatmul.mubr.f32.gmra.mrb[0].mxu0 %v28
  %v207 = vpop.f32.mrb[0].mxu0
  %v208 = vadd.f32 0.0, %v207
  %v209 = vpop.f32.mrb[0].mxu0
  %210 = vdwg.mxu0
  %v211 = vadd.f32 %v25, %v27
  %v212 = vadd.f32 %v26, %v28
  %v213 = vadd.f32 %v29, %v45
  %v214 = vadd.f32 %v30, %v46
  %v215 = vadd.f32 %v31, %v47
  %v216 = vadd.f32 %v32, %v48
  %v217 = vadd.f32 %v33, %v49
  %v218 = vadd.f32 %v34, %v50
  %v219 = vadd.f32 %v35, %v51
  %v220 = vadd.f32 %v36, %v52
  %v221 = vadd.f32 %v37, %v53
  %v222 = vadd.f32 %v38, %v54
  %v223 = vadd.f32 %v39, %v55
  %v224 = vadd.f32 %v40, %v56
  %v225 = vadd.f32 %v41, %v57
  %v226 = vadd.f32 %v42, %v58
  %v227 = vadd.f32 %v43, %v59
  %v228 = vadd.f32 %v44, %v60
  %229 = vmatprep.subr.mxu0 0.0
  %230 = vmatpush1.msra.mxu0 %v213
  %231 = vmatprep.subr.mxu0 0.0
  %232 = vmatpush1.msra.mxu0 %v214
  %233 = vmatprep.subr.mxu0 0.0
  %234 = vmatpush1.msra.mxu0 %v215
  %235 = vmatprep.subr.mxu0 0.0
  %236 = vmatpush1.msra.mxu0 %v216
  %237 = vmatprep.subr.mxu0 0.0
  %238 = vmatpush1.msra.mxu0 %v217
  %239 = vmatprep.subr.mxu0 0.0
  %240 = vmatpush1.msra.mxu0 %v218
  %241 = vmatprep.subr.mxu0 0.0
  %242 = vmatpush1.msra.mxu0 %v219
  %243 = vmatprep.subr.mxu0 0.0
  %244 = vmatpush1.msra.mxu0 %v220
  %245 = vmatprep.subr.mxu0 0.0
  %246 = vmatpush1.msra.mxu0 %v221
  %247 = vmatprep.subr.mxu0 0.0
  %248 = vmatpush1.msra.mxu0 %v222
  %249 = vmatprep.subr.mxu0 0.0
  %250 = vmatpush1.msra.mxu0 %v223
  %251 = vmatprep.subr.mxu0 0.0
  %252 = vmatpush1.msra.mxu0 %v224
  %253 = vmatprep.subr.mxu0 0.0
  %254 = vmatpush1.msra.mxu0 %v225
  %255 = vmatprep.subr.mxu0 0.0
  %256 = vmatpush1.msra.mxu0 %v226
  %257 = vmatprep.subr.mxu0 0.0
  %258 = vmatpush1.msra.mxu0 %v227
  %259 = vmatprep.subr.mxu0 0.0
  %260 = vmatpush1.msra.mxu0 %v228
  %261 = vmatprep.subr.mxu0 0.0
  %262 = vmatpush1.msra.mxu0 0.0
  %263 = vmatprep.subr.mxu0 0.0
  %264 = vmatpush1.msra.mxu0 0.0
  %265 = vmatprep.subr.mxu0 0.0
  %266 = vmatpush1.msra.mxu0 0.0
  %267 = vmatprep.subr.mxu0 0.0
  %268 = vmatpush1.msra.mxu0 0.0
  %269 = vmatprep.subr.mxu0 0.0
  %270 = vmatpush1.msra.mxu0 0.0
  %271 = vmatprep.subr.mxu0 0.0
  %272 = vmatpush1.msra.mxu0 0.0
  %273 = vmatprep.subr.mxu0 0.0
  %274 = vmatpush1.msra.mxu0 0.0
  %275 = vmatprep.subr.mxu0 0.0
  %276 = vmatpush1.msra.mxu0 0.0
  %277 = vmatprep.subr.mxu0 0.0
  %278 = vmatpush1.msra.mxu0 0.0
  %279 = vmatprep.subr.mxu0 0.0
  %280 = vmatpush1.msra.mxu0 0.0
  %281 = vmatprep.subr.mxu0 0.0
  %282 = vmatpush1.msra.mxu0 0.0
  %283 = vmatprep.subr.mxu0 0.0
  %284 = vmatpush1.msra.mxu0 0.0
  %285 = vmatprep.subr.mxu0 0.0
  %286 = vmatpush1.msra.mxu0 0.0
  %287 = vmatprep.subr.mxu0 0.0
  %288 = vmatpush1.msra.mxu0 0.0
  %289 = vmatprep.subr.mxu0 0.0
  %290 = vmatpush1.msra.mxu0 0.0
  %291 = vmatprep.subr.mxu0 0.0
  %292 = vmatpush1.msra.mxu0 0.0
  %293 = vmatprep.mubr.f32.mxu0 0.0
  %294 = vmatmul.mubr.f32.gmra.mrb[0].mxu0 %v211
  %v295 = vpop.f32.mrb[0].mxu0
  %v296 = vadd.f32 0.0, %v295
  %v297 = vpop.f32.mrb[0].mxu0
  %298 = vmatprep.mubr.f32.mxu0 0.0
  %299 = vmatmul.mubr.f32.gmra.mrb[0].mxu0 %v212
  %v300 = vpop.f32.mrb[0].mxu0
  %v301 = vadd.f32 0.0, %v300
  %v302 = vpop.f32.mrb[0].mxu0
  %303 = vdwg.mxu0
  %v304 = vsub.f32 %v128, %v203
  %v305 = vsub.f32 %v133, %v208
  %v306 = vadd.f32 %v128, %v203
  %v307 = vadd.f32 %v133, %v208
  %v308 = vld [vmem:[%s4] sm:$0x1]
  %v310 = vlaneseq
  %v311 = vshrl.u32 %v310, 7
  %v312 = vsub.s32 0, %v311
  %v313 = vrot.slane %v308, %v312
  %v315 = vadd.f32 %v304, %v313
  %v316 = vadd.f32 %v305, %v313
  %317 = vst [vmem:[%s6] sm:$0xff] %v315
  %318 = vst [vmem:[%s6 + $0x8] sm:$0xff] %v316
  %v319 = vsub.f32 %v296, %v306
  %v320 = vsub.f32 %v301, %v307
  %v321 = vld [vmem:[%s5] sm:$0x1]
  %v323 = vlaneseq
  %v324 = vshrl.u32 %v323, 7
  %v325 = vsub.s32 0, %v324
  %v326 = vrot.slane %v321, %v325
  %v328 = vadd.f32 %v319, %v326
  %v329 = vadd.f32 %v320, %v326
  %330 = vst [vmem:[%s7] sm:$0xff] %v328
  %331 = vst [vmem:[%s7 + $0x8] sm:$0xff] %v329
  // Predicated region
  $region26: #{complex_linear.1} parent=0 // pred_check
    _
  $region27: #{complex_linear.1} parent=0 // pred_check_branch
    %333 = sbr.rel (0) target = $region29
  $region28: #{complex_linear.1} parent=0 // pred_region
    _
  $region29: #{complex_linear.1} parent=0 // pred_fallthru
    _
  // Predicated region
  $region30: #{complex_linear.1} parent=0 // pred_check
    _
  $region31: #{complex_linear.1} parent=0 // pred_check_branch
    %335 = sbr.rel (0) target = $region33
  $region32: #{complex_linear.1} parent=0 // pred_region
    _
  $region33: #{complex_linear.1} parent=0 // pred_fallthru
    _
  // Predicated region
  $region34: #{complex_linear.1} parent=0 // pred_check
    _
  $region35: #{complex_linear.1} parent=0 // pred_check_branch
    %337 = sbr.rel (0) target = $region37
  $region36: #{complex_linear.1} parent=0 // pred_region
    _
  $region37: #{complex_linear.1} parent=0 // pred_fallthru
    _
  // Predicated region
  $region38: #{complex_linear.1} parent=0 // pred_check
    _
  $region39: #{complex_linear.1} parent=0 // pred_check_branch
    %339 = sbr.rel (0) target = $region41
  $region40: #{complex_linear.1} parent=0 // pred_region
    _
  $region41: #{complex_linear.1} parent=0 // pred_fallthru
    _

</llo_original>
